<compile_context>
chip_gen: v7x
topology: tpu7x:2x2x1
jax: 0.10.0
libtpu: 0.0.40
codegen_flags: <defaults>
</compile_context>

<pallas_src>
import jax
import jax.numpy as jnp
from jax.experimental import pallas as pl
from jax.experimental.pallas import tpu as pltpu

_MiB = 1024 * 1024


# ---------------------------------------------------------------------------
# Kernels
# ---------------------------------------------------------------------------
def _make_fullk_kernel(compute_dtype):
    """Full reduction axis resident in VMEM: o = x @ w + b in one MXU burst."""
    def kernel(x_ref, w_ref, b_ref, o_ref):
        lhs = x_ref[...]
        rhs = w_ref[...]
        if compute_dtype is not None:          # per-tile cast (no wrapper pass)
            lhs = lhs.astype(compute_dtype)
            rhs = rhs.astype(compute_dtype)
        acc = jnp.dot(lhs, rhs, preferred_element_type=jnp.float32)
        o_ref[...] = (acc + b_ref[...].astype(jnp.float32)).astype(o_ref.dtype)
    return kernel


def _make_tiledk_kernel(compute_dtype, use_scratch):
    """K-tiled reduction.  f32 outputs accumulate directly into o_ref (its
    block index ignores k, so it is VMEM-resident across the reduction);
    narrower output dtypes go through an f32 scratch accumulator."""
    def kernel(x_ref, w_ref, b_ref, o_ref, *scratch):
        acc_ref = scratch[0] if use_scratch else o_ref
        k = pl.program_id(2)

        @pl.when(k == 0)
        def _init():
            # Bias folded into the accumulator init -> added exactly once.
            acc_ref[...] = jnp.broadcast_to(
                b_ref[...].astype(jnp.float32), acc_ref.shape)

        lhs = x_ref[...]
        rhs = w_ref[...]
        if compute_dtype is not None:
            lhs = lhs.astype(compute_dtype)
            rhs = rhs.astype(compute_dtype)
        acc_ref[...] += jnp.dot(lhs, rhs, preferred_element_type=jnp.float32)

        if use_scratch:
            @pl.when(k == pl.num_programs(2) - 1)
            def _finalize():
                o_ref[...] = acc_ref[...].astype(o_ref.dtype)
    return kernel


# ---------------------------------------------------------------------------
# Generation-aware sizing helpers
# ---------------------------------------------------------------------------
def _vmem_limits():
    """(vmem_limit_bytes, working-set budget) derived from the actual chip:
    ~48 MiB limit on v7x (64 MiB physical / TC), ~96 MiB on v5e/v6e (128 MiB)."""
    try:
        phys = int(pltpu.get_tpu_info().vmem_capacity_bytes)
    except Exception:
        phys = 64 * _MiB                     # conservative: v7x per-TC VMEM
    vmem_limit = (phys * 3) // 4             # headroom for compiler scratch
    ws_budget = (vmem_limit * 4) // 5        # target for our double buffers
    return vmem_limit, ws_budget


def _sublane(itemsize):
    # minimum second-to-last-dim multiple: f32 -> 8, bf16 -> 16, int8/fp8 -> 32
    return max(8, 32 // itemsize)


def _pick_tile(dim, target, align):
    """Tile for a cdiv-gridded (M or N) axis: full extent if it already fits
    the target, else the largest align-multiple <= target (Pallas masks the
    trailing partial block)."""
    if dim <= target:
        return dim
    return max(align, (target // align) * align)


def _pick_k_tile(dim, target, lane_align):
    """K (reduction) tiles must cover the axis exactly: a lane-aligned divisor
    of dim, or the full extent (a padded trailing K block would corrupt the
    accumulated sum)."""
    if dim <= target:
        return dim
    for align in (lane_align, 128):
        t = (target // align) * align
        while t >= align:
            if dim % t == 0:
                return t
            t -= align
    return dim                                # full K is always exact


def _working_set(tm, tn, tk, x_itm, w_itm, o_itm, with_acc):
    ws = 2 * (tm * tk * x_itm + tk * tn * w_itm + tn * 4)   # double-buffered ins
    ws += 2 * tm * tn * o_itm                                # double-buffered out
    if with_acc:
        ws += tm * tn * 4                                    # f32 scratch
    return ws


def _choose_tiles(batch, in_f, out_f, x_itm, w_itm, o_itm, budget,
                  m_align, lane_align, max_tile_k, with_acc_if_tiled):
    # Path 1: resident weight / full-K.  The reduction axis collapses, the
    # weight is fetched from HBM once, no accumulator needed.  Preferred
    # whenever it fits the VMEM working-set budget.
    if max_tile_k is None or max_tile_k >= in_f:
        for tn_t in (max(out_f, lane_align), 2048, 1024, 512, 256):
            tn = _pick_tile(out_f, tn_t, lane_align)
            for tm_t in (1024, 512, 256):
                tm = _pick_tile(batch, tm_t, m_align)
                if _working_set(tm, tn, in_f, x_itm, w_itm, o_itm,
                                False) <= budget:
                    return tm, tn, in_f
    # Path 2: K-tiled reduction for layers whose K slab cannot be resident.
    k_cap = in_f if max_tile_k is None else max(128, min(max_tile_k, in_f))
    for tk_t in (2048, 1024, 512, 256, 128):
        tk = _pick_k_tile(in_f, min(tk_t, k_cap), lane_align)
        for tn_t in (1024, 512, 256, 128):
            tn = _pick_tile(out_f, tn_t, lane_align)
            for tm_t in (512, 256, 128, 64, 32, 16, 8):
                tm = _pick_tile(batch, tm_t, m_align)
                if _working_set(tm, tn, tk, x_itm, w_itm, o_itm,
                                with_acc_if_tiled) <= budget:
                    return tm, tn, tk
    # Path 3: degenerate fallback (tiny budget): smallest legal tiles.
    return (min(batch, m_align), min(out_f, 128),
            _pick_k_tile(in_f, 128, lane_align))


# ---------------------------------------------------------------------------
# Wrapper
# ---------------------------------------------------------------------------
def data_parallel_forward(x, weight_t, bias, num_devices, *,
                          compute_dtype=jnp.bfloat16, max_tile_k=None):
    """Mirrors DataParallel(Linear, device_ids=range(num_devices)).forward(x).

    x:        (batch, in_features)
    weight_t: (in_features, out_features) -- Linear weight stored pre-transposed
              (and optionally pre-cast to bf16) once at parameter-load time.
    bias:     (out_features,)
    compute_dtype: MXU operand dtype; operands are cast per-tile inside the
              kernel, accumulation is always float32.  None = keep dtypes.
    max_tile_k: optional cap on the K tile (exercises the K-tiled path).
    """
    batch, in_f = x.shape
    in_f_w, out_f = weight_t.shape
    assert in_f == in_f_w, "weight_t must be (in_features, out_features)"
    if batch < num_devices:
        raise ValueError(
            f"Batch size ({batch}) must be >= number of devices ({num_devices})")
    # Replicas are identical, so the output equals module(x) regardless of how
    # torch.chunk would split the batch; tiling is decoupled from num_devices.

    out_dtype = jnp.dtype(x.dtype)
    b2d = bias.reshape(1, out_f)

    x_itm = jnp.dtype(x.dtype).itemsize
    w_itm = jnp.dtype(weight_t.dtype).itemsize
    o_itm = out_dtype.itemsize
    m_align = max(_sublane(x_itm), _sublane(o_itm))
    lane_align = 256   # multiple of both the 256-wide (v6e/v7x) and 128-wide (v5e) MXU

    vmem_limit, ws_budget = _vmem_limits()
    use_scratch_if_tiled = (out_dtype != jnp.float32)
    tm, tn, tk = _choose_tiles(batch, in_f, out_f, x_itm, w_itm, o_itm,
                               ws_budget, m_align, lane_align, max_tile_k,
                               use_scratch_if_tiled)

    # v7x has 2 TensorCores; keep >= 2 tiles on the "parallel" axes when the
    # batch allows (near-free elsewhere: the weight block index stays constant).
    if pl.cdiv(batch, tm) * pl.cdiv(out_f, tn) < 2 and batch > m_align:
        tm_half = ((pl.cdiv(batch, 2) + m_align - 1) // m_align) * m_align
        if tm_half < batch:
            tm = tm_half

    n_m, n_n, n_k = pl.cdiv(batch, tm), pl.cdiv(out_f, tn), pl.cdiv(in_f, tk)
    full_k = (tk == in_f)

    # Realistic HBM traffic: full-K path streams x once (its block index only
    # depends on i) and the weight once per M tile (once total when n_n == 1);
    # tiled-K re-reads x per N tile and the weight per M tile.
    if full_k:
        x_reads, w_reads = 1, (1 if n_n == 1 else n_m)
    else:
        x_reads, w_reads = n_n, n_m
    cost = pl.CostEstimate(
        flops=2 * batch * in_f * out_f,
        transcendentals=0,
        bytes_accessed=(x.size * x_itm * x_reads
                        + weight_t.size * w_itm * w_reads
                        + b2d.size * jnp.dtype(b2d.dtype).itemsize * n_n
                        + batch * out_f * o_itm))

    if full_k:
        kernel = _make_fullk_kernel(compute_dtype)
        grid_spec = pltpu.PrefetchScalarGridSpec(
            num_scalar_prefetch=0,
            grid=(n_m, n_n),
            in_specs=[
                # batch-row tile of x (the "split" axis is dim 0, as in PyTorch)
                pl.BlockSpec((tm, in_f), lambda i, j: (i, 0)),
                # resident (replicated) weight slab: full K, DMA'd once per N tile
                pl.BlockSpec((in_f, tn), lambda i, j: (0, j)),
                pl.BlockSpec((1, tn), lambda i, j: (0, j)),
            ],
            # "torch.cat(dim=0)" is just the contiguous row placement of M tiles
            out_specs=pl.BlockSpec((tm, tn), lambda i, j: (i, j)),
        )
        semantics = ("parallel", "parallel")
    else:
        kernel = _make_tiledk_kernel(compute_dtype, use_scratch_if_tiled)
        scratch = ([pltpu.VMEM((tm, tn), jnp.float32)]
                   if use_scratch_if_tiled else [])
        grid_spec = pltpu.PrefetchScalarGridSpec(
            num_scalar_prefetch=0,
            grid=(n_m, n_n, n_k),
            in_specs=[
                pl.BlockSpec((tm, tk), lambda i, j, k: (i, k)),
                pl.BlockSpec((tk, tn), lambda i, j, k: (k, j)),
                pl.BlockSpec((1, tn), lambda i, j, k: (0, j)),
            ],
            out_specs=pl.BlockSpec((tm, tn), lambda i, j, k: (i, j)),
            scratch_shapes=scratch,
        )
        semantics = ("parallel", "parallel", "arbitrary")
    # NOTE: pipeline_mode=pl.Buffered(3) on the streamed specs was considered
    # but left at the default depth: at these tile sizes the kernel is MXU- or
    # HBM-bandwidth-bound, not DMA-latency-bound.

    return pl.pallas_call(
        kernel,
        out_shape=jax.ShapeDtypeStruct((batch, out_f), out_dtype),
        grid_spec=grid_spec,
        compiler_params=pltpu.CompilerParams(
            dimension_semantics=semantics,
            vmem_limit_bytes=vmem_limit),
        cost_estimate=cost,
    )(x, weight_t, b2d)


def reference_forward(x, weight, bias, num_devices):
    """Pure-JAX mirror of DataParallel semantics: split, per-replica Linear, cat."""
    chunks = jnp.array_split(x, num_devices, axis=0)
    outs = [jnp.matmul(c, weight.T, precision=jax.lax.Precision.HIGHEST) + bias
            for c in chunks]
    return jnp.concatenate(outs, axis=0)


if __name__ == "__main__":
    key = jax.random.PRNGKey(0)
    (k_x, k_w, k_b, k_x2, k_w2, k_b2,
     k_x3, k_w3, k_b3) = jax.random.split(key, 9)

    num_devices = 2  # device_ids = [0, 1]

    # --- case 1: small demo (Linear(32, 32), batch=16), exact f32 path ------
    batch, hidden = 16, 32
    x = jax.random.normal(k_x, (batch, hidden), dtype=jnp.float32)
    weight = jax.random.normal(k_w, (hidden, hidden), dtype=jnp.float32) * 0.1
    bias = jax.random.normal(k_b, (hidden,), dtype=jnp.float32) * 0.1
    weight_t = jnp.asarray(weight.T)   # pre-transposed once at "load time"

    out = jax.block_until_ready(
        data_parallel_forward(x, weight_t, bias, num_devices,
                              compute_dtype=jnp.float32))
    ref = reference_forward(x, weight, bias, num_devices)
    assert out.shape == ref.shape
    assert jnp.allclose(out, ref, atol=1e-5, rtol=1e-5), "case 1 mismatch"

    # --- case 2: resident-weight path, f32 operands --------------------------
    b2, in2, out2 = 512, 1024, 384
    x2 = jax.random.normal(k_x2, (b2, in2), dtype=jnp.float32)
    w2 = jax.random.normal(k_w2, (out2, in2), dtype=jnp.float32) * 0.05
    bias2 = jax.random.normal(k_b2, (out2,), dtype=jnp.float32) * 0.1
    w2_t = jnp.asarray(w2.T)

    out_f32 = jax.block_until_ready(
        data_parallel_forward(x2, w2_t, bias2, num_devices,
                              compute_dtype=jnp.float32))
    ref_f32 = reference_forward(x2, w2, bias2, num_devices)
    assert out_f32.shape == ref_f32.shape
    assert jnp.allclose(out_f32, ref_f32, atol=1e-3, rtol=1e-3), "case 2 mismatch"

    # --- case 3: bf16 weight stored at load time, default bf16 compute -------
    w2_t_bf16 = w2_t.astype(jnp.bfloat16)   # halves weight HBM traffic / VMEM
    out_bf16 = jax.block_until_ready(
        data_parallel_forward(x2, w2_t_bf16, bias2, num_devices))
    ref_bf16 = (jnp.dot(x2.astype(jnp.bfloat16), w2_t_bf16,
                        preferred_element_type=jnp.float32) + bias2)
    assert out_bf16.dtype == jnp.float32
    assert jnp.allclose(out_bf16, ref_bf16, atol=5e-2, rtol=5e-2), "case 3 mismatch"

    # --- case 4: force the K-tiled reduction path (accumulate into o_ref) ----
    b3, in3, out3 = 128, 512, 256
    x3 = jax.random.normal(k_x3, (b3, in3), dtype=jnp.float32)
    w3 = jax.random.normal(k_w3, (out3, in3), dtype=jnp.float32) * 0.05
    bias3 = jax.random.normal(k_b3, (out3,), dtype=jnp.float32) * 0.1
    w3_t = jnp.asarray(w3.T)

    out_tiled = jax.block_until_ready(
        data_parallel_forward(x3, w3_t, bias3, num_devices,
                              compute_dtype=jnp.float32, max_tile_k=128))
    ref_tiled = reference_forward(x3, w3, bias3, num_devices)
    assert out_tiled.shape == ref_tiled.shape
    assert jnp.allclose(out_tiled, ref_tiled, atol=1e-3, rtol=1e-3), "case 4 mismatch"

    print("KERNEL_OK")
</pallas_src>

<mosaic_0001>
module attributes {stable_mosaic.version = 11 : i64} {
  func.func @kernel(%arg0: i32, %arg1: i32, %arg2: memref<8x32xf32, #tpu.memory_space<vmem>>, %arg3: memref<32x32xf32, #tpu.memory_space<vmem>>, %arg4: memref<1x32xf32, #tpu.memory_space<vmem>>, %arg5: memref<8x32xf32, #tpu.memory_space<vmem>>) attributes {dimension_semantics = [#tpu.dimension_semantics<parallel>, #tpu.dimension_semantics<parallel>], iteration_bounds = array<i64: 2, 1>, scalar_prefetch = 0 : i64, scratch_operands = 0 : i64, tpu.core_type = #tpu.core_type<tc>, window_params = [{transform_indices = @transform_0, window_bounds = array<i64: 8, 32>}, {transform_indices = @transform_1, window_bounds = array<i64: 32, 32>}, {transform_indices = @transform_2, window_bounds = array<i64: 1, 32>}, {transform_indices = @transform_3, window_bounds = array<i64: 8, 32>}]} {
    %c0 = arith.constant 0 : index
    %c0_0 = arith.constant 0 : index
    %0 = vector.load %arg2[%c0, %c0_0] : memref<8x32xf32, #tpu.memory_space<vmem>>, vector<8x32xf32>
    %c0_1 = arith.constant 0 : index
    %c0_2 = arith.constant 0 : index
    %1 = vector.load %arg3[%c0_1, %c0_2] : memref<32x32xf32, #tpu.memory_space<vmem>>, vector<32x32xf32>
    %cst = arith.constant dense<0.000000e+00> : vector<8x32xf32>
    %2 = tpu.matmul %0, %1, %cst {dimension_numbers = #tpu.dot_dimension_numbers<[1], [0], [0], [1], [0, 0, 1, 1], [], []>} : vector<8x32xf32>, vector<32x32xf32>, vector<8x32xf32> -> vector<8x32xf32>
    %c0_3 = arith.constant 0 : index
    %c0_4 = arith.constant 0 : index
    %3 = vector.load %arg4[%c0_3, %c0_4] : memref<1x32xf32, #tpu.memory_space<vmem>>, vector<1x32xf32>
    %4 = vector.broadcast %3 : vector<1x32xf32> to vector<8x32xf32>
    %5 = arith.addf %2, %4 : vector<8x32xf32>
    %c0_5 = arith.constant 0 : index
    %c0_6 = arith.constant 0 : index
    %6 = vector.load %arg5[%c0_5, %c0_6] : memref<8x32xf32, #tpu.memory_space<vmem>>, vector<8x32xf32>
    tpu.vector_store %arg5[%c0_5, %c0_6], %5 {strides = array<i32>} : memref<8x32xf32, #tpu.memory_space<vmem>>, vector<8x32xf32>,
    return
  }
  func.func @transform_0(%arg0: i32, %arg1: i32) -> (i32, i32) {
    %c0_i32 = arith.constant 0 : i32
    %c0_i32_0 = arith.constant 0 : i32
    return %arg0, %c0_i32 : i32, i32
  }
  func.func @transform_1(%arg0: i32, %arg1: i32) -> (i32, i32) {
    %c0_i32 = arith.constant 0 : i32
    %c0_i32_0 = arith.constant 0 : i32
    return %c0_i32, %arg1 : i32, i32
  }
  func.func @transform_2(%arg0: i32, %arg1: i32) -> (i32, i32) {
    %c0_i32 = arith.constant 0 : i32
    %c0_i32_0 = arith.constant 0 : i32
    return %c0_i32, %arg1 : i32, i32
  }
  func.func @transform_3(%arg0: i32, %arg1: i32) -> (i32, i32) {
    %c0_i32 = arith.constant 0 : i32
    return %arg0, %arg1 : i32, i32
  }
}

</mosaic_0001>

<llo_original>
// kernel: tpu_custom_call.1
$region0: #{tpu_custom_call.1}
  #allocation0 [shape = 'u32[]', space=smem, size = 0x4, offset = 0x4, fixed_abs, tag = 'smem constant byte address 0x4 - core index']
  #allocation1 [shape = 'u32[144,128]{1,0:T(1,128)}', space=vmem, size = 0x12000, scoped, tag = 'internal scratch']
  %s0 = inlined_call_operand.hbm [shape: f32[16,32], index: 0, kind: input, shape index: {}]
  %s1 = inlined_call_operand.hbm [shape: f32[32,32], index: 1, kind: input, shape index: {}]
  %s2 = inlined_call_operand.vmem [shape: f32[1,32], index: 2, kind: input, shape index: {}]
  %s3 = inlined_call_operand.hbm [shape: f32[16,32], index: 3, kind: output, shape index: {}]
  %s4 = sld [smem:[#allocation0]]
  $region53: #{tpu_custom_call.1} parent=0
    _
  %s6 = ssub.s32 1, %s4
  %s7 = scalar_select 0, %s6, %s4
  $region1: #{tpu_custom_call.1} parent=0
    #allocation2 [shape = 'u8[8192]{0}', space=vmem, size = 0x2000, scoped, tag = 'input window, operand 0']
    #allocation3 [shape = 's32[2]{0}', space=sflag, size = 0x8, scoped, tag = 'scoped memory for tpu_custom_call.1']
    #allocation4 [shape = 's32[2]{0}', space=sflag, size = 0x8, scoped, tag = 'scoped memory for tpu_custom_call.1']
    #allocation5 [shape = 'u8[16384]{0}', space=vmem, size = 0x4000, scoped, tag = 'input window, operand 1, single buffered']
    #allocation6 [shape = 's32[1]{0}', space=sflag, size = 0x4, scoped, tag = 'scoped memory for tpu_custom_call.1']
    #allocation7 [shape = 'u8[8192]{0}', space=vmem, size = 0x2000, scoped, tag = 'output window, operand 0']
    %8 = vsyncpa [#allocation3], 0
    %s9 = scalar_lea.sflag [#allocation3], 1
    %10 = vsyncpa %s9, 0
    %11 = vsyncpa [#allocation6], 0
    %12 = vsyncpa [#allocation4], 0
    %s13 = scalar_lea.sflag [#allocation4], 1
    %14 = vsyncpa %s13, 0
    loop: start=0, step=1, limit=4
    $region2: #{tpu_custom_call.1} parent=1 // loop_pre_header
      _
    $region3: #{tpu_custom_call.1} parent=1 // loop_header
      %s16 = sphi 0, %s20
      %p17 = scmp.ge.s32.totalorder %s16, 4
      %s23 = sphi 0, %s35
      %s24 = sphi 0, %s31
      %s25 = sphi 0, %s23
      %s26 = sphi 0, %s24
      %s27 = sphi 0, %s25
      %s28 = sphi 0, %s26
      %s38 = sphi 0, %s40
      %s41 = sphi 0, %s38
      %s42 = sphi 0, %s41
      %s58 = sphi 0, %s42
      %s64 = sphi 0, %s66
      %s67 = sphi 0, %s64
      %s68 = sphi 0, %s67
      %s84 = sphi 0, %s68
      %s90 = sphi 0, %s92
      %s93 = sphi 0, %s90
      %s94 = sphi 0, %s93
      %s110 = sphi 0, %s94
      %s118 = sphi 0, %s120
      %s121 = sphi 0, %s118
      %s122 = sphi 0, %s121
      %s138 = sphi 0, %s122
    $region4: #{tpu_custom_call.1} parent=1 // loop_header_branch
      %19 = sbr.rel (%p17) target = $region8
    $region5: #{tpu_custom_call.1} parent=1 // loop_body
      %s21 = ssub.s32 %s16, 1
      %s22 = ssub.s32 %s16, 2
      %s29 = sadd.s32 1, %s24
      %p30 = scmp.ge.s32.totalorder %s29, 1
      %s31 = scalar_select %p30, 0, %s29
      %s32 = sadd.s32 1, %s23
      %s33 = scalar_select %p30, %s32, %s23
      %p34 = scmp.ge.s32.totalorder %s33, 2
      %s35 = scalar_select %p34, 0, %s33
      %s36 = ssub.s32 %s23, %s35
      %p37 = scmp.eq.s32.totalorder %s36, 0
      %s39 = sadd.s32 %s38, 1
      %s40 = scalar_select %p37, %s38, %s39
      %p43 = pneg %p37
      %p44 = scmp.eq.s32.totalorder %s16, 1
      %p45 = por %p43, %p44
      %p46 = scmp.ne.s32.totalorder %s38, %s41
      %p47 = scmp.eq.s32.totalorder %s16, 0
      %p48 = por %p46, %p47
      %p49 = scmp.ne.s32.totalorder %s38, %s41
      %p50 = scmp.eq.s32.totalorder %s21, 1
      %p51 = por %p49, %p50
      %p52 = scmp.ne.s32.totalorder %s41, %s42
      %p53 = scmp.eq.s32.totalorder %s21, 0
      %p54 = por %p52, %p53
      %p55 = scmp.ne.s32.totalorder %s41, %s42
      %p56 = scmp.eq.s32.totalorder %s22, 1
      %p57 = por %p55, %p56
      %p59 = scmp.ne.s32.totalorder %s42, %s58
      %p60 = scmp.eq.s32.totalorder %s22, 0
      %p61 = por %p59, %p60
      %s62 = ssub.s32 %s24, %s31
      %p63 = scmp.eq.s32.totalorder %s62, 0
      %s65 = sadd.s32 %s64, 1
      %s66 = scalar_select %p63, %s64, %s65
      %p69 = pneg %p63
      %p70 = scmp.eq.s32.totalorder %s16, 1
      %p71 = por %p69, %p70
      %p72 = scmp.ne.s32.totalorder %s64, %s67
      %p73 = scmp.eq.s32.totalorder %s16, 0
      %p74 = por %p72, %p73
      %p75 = scmp.ne.s32.totalorder %s64, %s67
      %p76 = scmp.eq.s32.totalorder %s21, 1
      %p77 = por %p75, %p76
      %p78 = scmp.ne.s32.totalorder %s67, %s68
      %p79 = scmp.eq.s32.totalorder %s21, 0
      %p80 = por %p78, %p79
      %p81 = scmp.ne.s32.totalorder %s67, %s68
      %p82 = scmp.eq.s32.totalorder %s22, 1
      %p83 = por %p81, %p82
      %p85 = scmp.ne.s32.totalorder %s68, %s84
      %p86 = scmp.eq.s32.totalorder %s22, 0
      %p87 = por %p85, %p86
      %s88 = ssub.s32 %s24, %s31
      %p89 = scmp.eq.s32.totalorder %s88, 0
      %s91 = sadd.s32 %s90, 1
      %s92 = scalar_select %p89, %s90, %s91
      %p95 = pneg %p89
      %p96 = scmp.eq.s32.totalorder %s16, 1
      %p97 = por %p95, %p96
      %p98 = scmp.ne.s32.totalorder %s90, %s93
      %p99 = scmp.eq.s32.totalorder %s16, 0
      %p100 = por %p98, %p99
      %p101 = scmp.ne.s32.totalorder %s90, %s93
      %p102 = scmp.eq.s32.totalorder %s21, 1
      %p103 = por %p101, %p102
      %p104 = scmp.ne.s32.totalorder %s93, %s94
      %p105 = scmp.eq.s32.totalorder %s21, 0
      %p106 = por %p104, %p105
      %p107 = scmp.ne.s32.totalorder %s93, %s94
      %p108 = scmp.eq.s32.totalorder %s22, 1
      %p109 = por %p107, %p108
      %p111 = scmp.ne.s32.totalorder %s94, %s110
      %p112 = scmp.eq.s32.totalorder %s22, 0
      %p113 = por %p111, %p112
      %s114 = ssub.s32 %s23, %s35
      %s115 = ssub.s32 %s24, %s31
      %s116 = sor.u32 %s114, %s115
      %p117 = scmp.eq.s32.totalorder %s116, 0
      %s119 = sadd.s32 %s118, 1
      %s120 = scalar_select %p117, %s118, %s119
      %p123 = pneg %p117
      %p124 = scmp.eq.s32.totalorder %s16, 1
      %p125 = por %p123, %p124
      %p126 = scmp.ne.s32.totalorder %s118, %s121
      %p127 = scmp.eq.s32.totalorder %s16, 0
      %p128 = por %p126, %p127
      %p129 = scmp.ne.s32.totalorder %s118, %s121
      %p130 = scmp.eq.s32.totalorder %s21, 1
      %p131 = por %p129, %p130
      %p132 = scmp.ne.s32.totalorder %s121, %s122
      %p133 = scmp.eq.s32.totalorder %s21, 0
      %p134 = por %p132, %p133
      %p135 = scmp.ne.s32.totalorder %s121, %s122
      %p136 = scmp.eq.s32.totalorder %s22, 1
      %p137 = por %p135, %p136
      %p139 = scmp.ne.s32.totalorder %s122, %s138
      %p140 = scmp.eq.s32.totalorder %s22, 0
      %p141 = por %p139, %p140
      %p142 = scmp.le.s32.totalorder 1, %s16
      %p143 = scmp.lt.s32.totalorder %s16, 3
      %p144 = pnand %p142, %p143
      %p145 = pneg %p144
      // Predicated region
      $region9: #{tpu_custom_call.1} parent=5 // pred_check
        _
      $region10: #{tpu_custom_call.1} parent=5 // pred_check_branch
        %147 = sbr.rel (%p144) target = $region12
      $region11: #{tpu_custom_call.1} parent=5 // pred_region
        %s148 = ssub.s32 %s16, 1
        // Predicated region
        $region13: #{tpu_custom_call.1} parent=11 // pred_check
          %p149 = pneg %p80
        $region14: #{tpu_custom_call.1} parent=11 // pred_check_branch
          %151 = sbr.rel (%p149) target = $region16
        $region15: #{tpu_custom_call.1} parent=11 // pred_region
          %s153 = ssub.s32 512, 512
          %154 = vsyncadd [#allocation6], %s153
          %s155 = smul.addr %s26, 128
          %s156 = scalar_lea.hbm %s1, %s155
          %s157 = sshll.u32 [#allocation5], 4
          %s158 = int_to_ptr.vmem [resolvable:$true] %s157
          %163 = dma.hbm_to_vmem [thread:$0]  %s156, 512, %s158, [#allocation6], 128, 128, 8
        $region16: #{tpu_custom_call.1} parent=11 // pred_fallthru
          _
        // Predicated region
        $region17: #{tpu_custom_call.1} parent=11 // pred_check
          %p164 = pneg %p106
        $region18: #{tpu_custom_call.1} parent=11 // pred_check_branch
          %166 = sbr.rel (%p164) target = $region20
        $region19: #{tpu_custom_call.1} parent=11 // pred_region
          %p167 = scmp.lt.s32.totalorder %s26, 0
          %s168 = scalar_select %p167, %s26, 0
          %s169 = scalar_lea.vmem %s2, %s168
        $region20: #{tpu_custom_call.1} parent=11 // pred_fallthru
          _
      $region12: #{tpu_custom_call.1} parent=5 // pred_fallthru
        _
      %p170 = scmp.lt.s32.totalorder %s16, 2
      // Predicated region
      $region21: #{tpu_custom_call.1} parent=5 // pred_check
        %p171 = pneg %p170
      $region22: #{tpu_custom_call.1} parent=5 // pred_check_branch
        %173 = sbr.rel (%p171) target = $region24
      $region23: #{tpu_custom_call.1} parent=5 // pred_region
        // Predicated region
        $region25: #{tpu_custom_call.1} parent=23 // pred_check
          %p174 = pneg %p48
        $region26: #{tpu_custom_call.1} parent=23 // pred_check_branch
          %176 = sbr.rel (%p174) target = $region28
        $region27: #{tpu_custom_call.1} parent=23 // pred_region
          %s177 = sand.u32 %s38, 1
          %s178 = scalar_lea.sflag [#allocation3], %s177
          %s179 = sand.u32 %s38, 1
          %s180 = smul.addr %s179, 8
          %s181 = scalar_lea.vmem [#allocation2], %s180
          %s183 = ssub.s32 128, 128
          %184 = vsyncadd %s178, %s183
          %s185 = smul.addr %s23, 128
          %s186 = scalar_lea.hbm %s0, %s185
          %s188 = sshll.u32 %s181, 4
          %s189 = int_to_ptr.vmem [resolvable:$true] %s188
          %191 = dma.hbm_to_vmem [thread:$0]  %s186, 128, %s189, %s178
        $region28: #{tpu_custom_call.1} parent=23 // pred_fallthru
          _
      $region24: #{tpu_custom_call.1} parent=5 // pred_fallthru
        _
      %p192 = scmp.le.s32.totalorder 1, %s16
      %p193 = scmp.lt.s32.totalorder %s16, 3
      %p194 = pnand %p192, %p193
      %p195 = pneg %p194
      // Predicated region
      $region29: #{tpu_custom_call.1} parent=5 // pred_check
        _
      $region30: #{tpu_custom_call.1} parent=5 // pred_check_branch
        %197 = sbr.rel (%p194) target = $region32
      $region31: #{tpu_custom_call.1} parent=5 // pred_region
        %s198 = ssub.s32 %s16, 1
        %s199 = sand.u32 %s41, 1
        %s200 = scalar_lea.sflag [#allocation3], %s199
        %s201 = sand.u32 %s41, 1
        %s202 = smul.addr %s201, 8
        %s203 = scalar_lea.vmem [#allocation2], %s202
        // Predicated region
        $region33: #{tpu_custom_call.1} parent=31 // pred_check
          %p204 = pneg %p54
        $region34: #{tpu_custom_call.1} parent=31 // pred_check_branch
          %206 = sbr.rel (%p204) target = $region36
        $region35: #{tpu_custom_call.1} parent=31 // pred_region
          %207 = dma.done %s200, 128
        $region36: #{tpu_custom_call.1} parent=31 // pred_fallthru
          _
        // Predicated region
        $region37: #{tpu_custom_call.1} parent=31 // pred_check
          %p208 = pneg %p80
        $region38: #{tpu_custom_call.1} parent=31 // pred_check_branch
          %210 = sbr.rel (%p208) target = $region40
        $region39: #{tpu_custom_call.1} parent=31 // pred_region
          %211 = dma.done [#allocation6], 512
        $region40: #{tpu_custom_call.1} parent=31 // pred_fallthru
          _
        %s212 = sand.u32 %s41, 1
        %s213 = scalar_lea.sflag [#allocation3], %s212
        %s214 = sand.u32 %s41, 1
        %s215 = smul.addr %s214, 8
        %s216 = scalar_lea.vmem [#allocation2], %s215
        %p217 = pneg %p54
        %p218 = pneg %p51
        %p219 = pneg %p80
        %p220 = pneg %p77
        %p221 = scmp.lt.s32.totalorder %s26, 0
        %s222 = scalar_select %p221, %s26, 0
        %s223 = scalar_lea.vmem %s2, %s222
        %p224 = pneg %p106
        %p225 = pneg %p103
        %p226 = pneg %p134
        %p227 = pneg %p131
        %s228 = sand.u32 %s121, 1
        %s229 = scalar_lea.sflag [#allocation4], %s228
        %s230 = sand.u32 %s121, 1
        %s231 = smul.addr %s230, 8
        %s232 = scalar_lea.vmem [#allocation7], %s231
        %p233 = scmp.lt.s32.totalorder %s26, 0
        %s234 = scalar_select %p233, %s26, 0
        %s235 = scalar_lea.vmem %s2, %s234
        %v236 = vld [vmem:[%s203] sm:$0xff]
        %v237 = vld [vmem:[#allocation5] sm:$0xff]
        %v238 = vld [vmem:[#allocation5 + $0x8] sm:$0xff]
        %v239 = vld [vmem:[#allocation5 + $0x10] sm:$0xff]
        %v240 = vld [vmem:[#allocation5 + $0x18] sm:$0xff]
        %v241 = vld [vmem:[%s235] sm:$0x1]
        %v243 = vlaneseq
        %v244 = vshrl.u32 %v243, 7
        %v245 = vsub.s32 0, %v244
        %v246 = vrot.slane %v241, %v245
        %vm248 = vcmask 261120
        %v250 = vsel %vm248, %v236, 0
        %252 = vmatprep.subr.mxu0 0.0
        %253 = vmatpush1.msra.mxu0 %v237
        %254 = vmatprep.subr.mxu0 0.0
        %255 = vmatpush1.msra.mxu0 %v238
        %256 = vmatprep.subr.mxu0 0.0
        %257 = vmatpush1.msra.mxu0 %v239
        %258 = vmatprep.subr.mxu0 0.0
        %259 = vmatpush1.msra.mxu0 %v240
        %260 = vmatprep.subr.mxu0 0.0
        %261 = vmatpush1.msra.mxu0 0.0
        %262 = vmatprep.subr.mxu0 0.0
        %263 = vmatpush1.msra.mxu0 0.0
        %264 = vmatprep.subr.mxu0 0.0
        %265 = vmatpush1.msra.mxu0 0.0
        %266 = vmatprep.subr.mxu0 0.0
        %267 = vmatpush1.msra.mxu0 0.0
        %268 = vmatprep.subr.mxu0 0.0
        %269 = vmatpush1.msra.mxu0 0.0
        %270 = vmatprep.subr.mxu0 0.0
        %271 = vmatpush1.msra.mxu0 0.0
        %272 = vmatprep.subr.mxu0 0.0
        %273 = vmatpush1.msra.mxu0 0.0
        %274 = vmatprep.subr.mxu0 0.0
        %275 = vmatpush1.msra.mxu0 0.0
        %276 = vmatprep.subr.mxu0 0.0
        %277 = vmatpush1.msra.mxu0 0.0
        %278 = vmatprep.subr.mxu0 0.0
        %279 = vmatpush1.msra.mxu0 0.0
        %280 = vmatprep.subr.mxu0 0.0
        %281 = vmatpush1.msra.mxu0 0.0
        %282 = vmatprep.subr.mxu0 0.0
        %283 = vmatpush1.msra.mxu0 0.0
        %284 = vmatprep.subr.mxu0 0.0
        %285 = vmatpush1.msra.mxu0 0.0
        %286 = vmatprep.subr.mxu0 0.0
        %287 = vmatpush1.msra.mxu0 0.0
        %288 = vmatprep.subr.mxu0 0.0
        %289 = vmatpush1.msra.mxu0 0.0
        %290 = vmatprep.subr.mxu0 0.0
        %291 = vmatpush1.msra.mxu0 0.0
        %292 = vmatprep.subr.mxu0 0.0
        %293 = vmatpush1.msra.mxu0 0.0
        %294 = vmatprep.subr.mxu0 0.0
        %295 = vmatpush1.msra.mxu0 0.0
        %296 = vmatprep.subr.mxu0 0.0
        %297 = vmatpush1.msra.mxu0 0.0
        %298 = vmatprep.subr.mxu0 0.0
        %299 = vmatpush1.msra.mxu0 0.0
        %300 = vmatprep.subr.mxu0 0.0
        %301 = vmatpush1.msra.mxu0 0.0
        %302 = vmatprep.subr.mxu0 0.0
        %303 = vmatpush1.msra.mxu0 0.0
        %304 = vmatprep.subr.mxu0 0.0
        %305 = vmatpush1.msra.mxu0 0.0
        %306 = vmatprep.subr.mxu0 0.0
        %307 = vmatpush1.msra.mxu0 0.0
        %308 = vmatprep.subr.mxu0 0.0
        %309 = vmatpush1.msra.mxu0 0.0
        %310 = vmatprep.subr.mxu0 0.0
        %311 = vmatpush1.msra.mxu0 0.0
        %312 = vmatprep.subr.mxu0 0.0
        %313 = vmatpush1.msra.mxu0 0.0
        %314 = vmatprep.subr.mxu0 0.0
        %315 = vmatpush1.msra.mxu0 0.0
        %316 = vmatprep.mubr.f32.mxu0 0.0
        %317 = vmatmul.mubr.f32.gmra.mrb[0].mxu0 %v250
        %v318 = vpop.f32.mrb[0].mxu0
        %v319 = vadd.f32 %v246, %v318
        %v320 = vpop.f32.mrb[0].mxu0
        %321 = vdwg.mxu0
        %322 = vst.msk [vmem:[%s232] sm:$0xff] %vm248, %v319
        %s323 = sand.u32 %s121, 1
        %s324 = scalar_lea.sflag [#allocation4], %s323
        %s325 = sand.u32 %s121, 1
        %s326 = smul.addr %s325, 8
        %s327 = scalar_lea.vmem [#allocation7], %s326
        // Predicated region
        $region41: #{tpu_custom_call.1} parent=31 // pred_check
          %p328 = pneg %p131
        $region42: #{tpu_custom_call.1} parent=31 // pred_check_branch
          %330 = sbr.rel (%p328) target = $region44
        $region43: #{tpu_custom_call.1} parent=31 // pred_region
          %s332 = ssub.s32 128, 128
          %333 = vsyncadd %s324, %s332
          %s334 = sadd.s32 %s26, %s25
          %s335 = smul.addr %s334, 128
          %s336 = scalar_lea.hbm %s3, %s335
          %s338 = sshll.u32 %s327, 4
          %s339 = int_to_ptr.vmem [resolvable:$true] %s338
          %341 = dma.vmem_to_hbm [thread:$0]  %s339, 128, %s336, %s324
        $region44: #{tpu_custom_call.1} parent=31 // pred_fallthru
          _
      $region32: #{tpu_custom_call.1} parent=5 // pred_fallthru
        _
      %p342 = scmp.le.s32.totalorder 2, %s16
      // Predicated region
      $region45: #{tpu_custom_call.1} parent=5 // pred_check
        %p343 = pneg %p342
      $region46: #{tpu_custom_call.1} parent=5 // pred_check_branch
        %345 = sbr.rel (%p343) target = $region48
      $region47: #{tpu_custom_call.1} parent=5 // pred_region
        %s346 = ssub.s32 %s16, 2
        // Predicated region
        $region49: #{tpu_custom_call.1} parent=47 // pred_check
          %p347 = pneg %p137
        $region50: #{tpu_custom_call.1} parent=47 // pred_check_branch
          %349 = sbr.rel (%p347) target = $region52
        $region51: #{tpu_custom_call.1} parent=47 // pred_region
          %s350 = sand.u32 %s122, 1
          %s351 = scalar_lea.sflag [#allocation4], %s350
          %s352 = sand.u32 %s122, 1
          %s353 = smul.addr %s352, 8
          %s354 = scalar_lea.vmem [#allocation7], %s353
          %355 = dma.done %s351, 128
        $region52: #{tpu_custom_call.1} parent=47 // pred_fallthru
          _
      $region48: #{tpu_custom_call.1} parent=5 // pred_fallthru
        _
    $region6: #{tpu_custom_call.1} parent=1 // loop_footer
      %s20 = sadd.s32 1, %s16
    $region7: #{tpu_custom_call.1} parent=1 // loop_footer_branch
      %15 = sbr.rel target = $region3
    $region8: #{tpu_custom_call.1} parent=1 // loop_exit
      _
    %356 = vsyncpa [#allocation3], 1
    %s357 = scalar_lea.sflag [#allocation3], 1
    %358 = vsyncpa %s357, 1
    %359 = vsyncpa [#allocation6], 1
    %360 = vsyncpa [#allocation4], 1
    %s361 = scalar_lea.sflag [#allocation4], 1
    %362 = vsyncpa %s361, 1

</llo_original>
